<compile_context>
chip_gen: v5e
topology: v5e:2x2
jax: 0.10.0
libtpu: 0.0.40
codegen_flags: <defaults>
</compile_context>

<pallas_src>
import jax
import jax.numpy as jnp
from jax.experimental import pallas as pl
from jax.experimental.pallas import tpu as pltpu

_LANE = 128
_SUBLANE = 8


def _mlp_kernel(x_ref, w1_ref, b1_ref, w2_ref, b2_ref, o_ref):
    # fc1: (TB, In)bf16 @ (In, H)bf16 -> f32 accumulator on the MXU
    h = jnp.dot(x_ref[...], w1_ref[...], preferred_element_type=jnp.float32)
    # bias add + ReLU in fp32 on the VPU
    h = jnp.maximum(h + b1_ref[...], 0.0)
    # explicit mixed-precision policy: fp32 accumulator -> bf16 operand for fc2
    y = jnp.dot(h.astype(jnp.bfloat16), w2_ref[...],
                preferred_element_type=jnp.float32)
    # lane-dense store: o_ref last dim is a multiple of 128 (padded)
    o_ref[...] = (y + b2_ref[...]).astype(o_ref.dtype)


def simple_nn_forward(x, w1, b1, w2, b2, *, tile_b=256):
    """x: (B, In); w1: (In, H); b1: (H,); w2: (H, Out); b2: (Out,)."""
    B, In = x.shape
    H = w1.shape[1]
    Out = w2.shape[1]

    # ---- lane-dense output padding (zero columns, sliced off at the end) ----
    out_p = ((Out + _LANE - 1) // _LANE) * _LANE
    w2_pad = jnp.pad(w2, ((0, 0), (0, out_p - Out)))
    b2_pad = jnp.pad(b2, (0, out_p - Out))

    # ---- batch tiling (multiple of 8 sublanes) ----
    tb = min(tile_b, ((B + _SUBLANE - 1) // _SUBLANE) * _SUBLANE)
    tb = ((tb + _SUBLANE - 1) // _SUBLANE) * _SUBLANE
    b_pad = ((B + tb - 1) // tb) * tb
    x_pad = jnp.pad(x, ((0, b_pad - B), (0, 0))) if b_pad != B else x

    # ---- operand dtypes: bf16 into the MXU, fp32 biases for VPU elementwise ----
    x_b = x_pad.astype(jnp.bfloat16)
    w1_b = w1.astype(jnp.bfloat16)
    w2_b = w2_pad.astype(jnp.bfloat16)
    b1_2d = b1.reshape(1, H).astype(jnp.float32)
    b2_2d = b2_pad.reshape(1, out_p).astype(jnp.float32)

    grid = (b_pad // tb,)

    # ---- cost estimate (advisory for XLA scheduling) ----
    flops = 2 * b_pad * (In * H + H * out_p)
    bytes_accessed = (
        b_pad * In * 2            # x (bf16)
        + In * H * 2 + H * out_p * 2   # weights (bf16)
        + (H + out_p) * 4         # biases (f32)
        + b_pad * out_p * 4       # output (f32)
    )

    # ---- scoped-VMEM estimate: 2x buffered streamed tiles + resident weights ----
    vmem_est = (
        2 * (tb * In * 2 + tb * out_p * 4)
        + (In * H + H * out_p) * 2
        + (H + out_p) * 4
        + tb * H * 4  # fc1 activation temp
    )
    cp_kwargs = dict(dimension_semantics=("parallel",))
    if vmem_est > 12 * 1024 * 1024:
        # raise the scoped limit only when big batch tiles actually need it
        cp_kwargs["vmem_limit_bytes"] = min(2 * vmem_est, 64 * 1024 * 1024)

    out_full = pl.pallas_call(
        _mlp_kernel,
        out_shape=jax.ShapeDtypeStruct((b_pad, out_p), jnp.float32),
        grid_spec=pl.GridSpec(
            grid=grid,
            in_specs=[
                pl.BlockSpec((tb, In), lambda i: (i, 0)),      # x tile streams
                pl.BlockSpec((In, H), lambda i: (0, 0)),       # w1 resident
                pl.BlockSpec((1, H), lambda i: (0, 0)),        # b1 resident
                pl.BlockSpec((H, out_p), lambda i: (0, 0)),    # w2 resident
                pl.BlockSpec((1, out_p), lambda i: (0, 0)),    # b2 resident
            ],
            out_specs=pl.BlockSpec((tb, out_p), lambda i: (i, 0)),
        ),
        compiler_params=pltpu.CompilerParams(**cp_kwargs),
        cost_estimate=pl.CostEstimate(
            flops=flops, transcendentals=0, bytes_accessed=bytes_accessed),
    )(x_b, w1_b, b1_2d, w2_b, b2_2d)

    # slice off batch padding and the zero-padded output lanes
    return out_full[:B, :Out]


if __name__ == "__main__":
    # Small shapes consistent with the module's forward:
    batch, input_size, hidden_size, output_size = 8, 32, 64, 16

    key = jax.random.PRNGKey(0)
    kx, kw1, kb1, kw2, kb2 = jax.random.split(key, 5)

    x = jax.random.normal(kx, (batch, input_size), dtype=jnp.float32)

    # Deterministic parameter init (uniform, like PyTorch Linear's scheme).
    lim1 = 1.0 / jnp.sqrt(input_size)
    lim2 = 1.0 / jnp.sqrt(hidden_size)
    w1 = jax.random.uniform(kw1, (input_size, hidden_size),
                            minval=-lim1, maxval=lim1, dtype=jnp.float32)
    b1 = jax.random.uniform(kb1, (hidden_size,),
                            minval=-lim1, maxval=lim1, dtype=jnp.float32)
    w2 = jax.random.uniform(kw2, (hidden_size, output_size),
                            minval=-lim2, maxval=lim2, dtype=jnp.float32)
    b2 = jax.random.uniform(kb2, (output_size,),
                            minval=-lim2, maxval=lim2, dtype=jnp.float32)

    out = simple_nn_forward(x, w1, b1, w2, b2)
    out = jax.block_until_ready(out)
    assert out.shape == (batch, output_size)

    # Reference with the same mixed-precision policy (bf16 operands, f32 acc).
    xb = x.astype(jnp.bfloat16)
    w1b = w1.astype(jnp.bfloat16)
    w2b = w2.astype(jnp.bfloat16)
    h_ref = jnp.maximum(
        jnp.dot(xb, w1b, preferred_element_type=jnp.float32) + b1, 0.0)
    ref = jnp.dot(h_ref.astype(jnp.bfloat16), w2b,
                  preferred_element_type=jnp.float32) + b2
    assert jnp.allclose(out, ref, atol=1e-3, rtol=1e-3)

    # Sanity vs full-fp32 math (loose tolerance for bf16 operands).
    ref_f32 = jnp.maximum(x @ w1 + b1, 0.0) @ w2 + b2
    assert jnp.allclose(out, ref_f32, atol=5e-2, rtol=5e-2)

    print("KERNEL_OK")
</pallas_src>

<mosaic_0001>
module attributes {stable_mosaic.version = 11 : i64} {
  func.func @_mlp_kernel(%arg0: i32, %arg1: memref<8x32xbf16, #tpu.memory_space<vmem>>, %arg2: memref<32x64xbf16, #tpu.memory_space<vmem>>, %arg3: memref<1x64xf32, #tpu.memory_space<vmem>>, %arg4: memref<64x128xbf16, #tpu.memory_space<vmem>>, %arg5: memref<1x128xf32, #tpu.memory_space<vmem>>, %arg6: memref<8x128xf32, #tpu.memory_space<vmem>>) attributes {dimension_semantics = [#tpu.dimension_semantics<parallel>], iteration_bounds = array<i64: 1>, scalar_prefetch = 0 : i64, scratch_operands = 0 : i64, tpu.core_type = #tpu.core_type<tc>, window_params = [{transform_indices = @transform_0, window_bounds = array<i64: 8, 32>}, {pipeline_mode = #tpu.pipeline_mode<synchronous>, transform_indices = @transform_1, window_bounds = array<i64: 32, 64>}, {pipeline_mode = #tpu.pipeline_mode<synchronous>, transform_indices = @transform_2, window_bounds = array<i64: 1, 64>}, {pipeline_mode = #tpu.pipeline_mode<synchronous>, transform_indices = @transform_3, window_bounds = array<i64: 64, 128>}, {pipeline_mode = #tpu.pipeline_mode<synchronous>, transform_indices = @transform_4, window_bounds = array<i64: 1, 128>}, {transform_indices = @transform_5, window_bounds = array<i64: 8, 128>}]} {
    %c0 = arith.constant 0 : index
    %c0_0 = arith.constant 0 : index
    %0 = vector.load %arg1[%c0, %c0_0] : memref<8x32xbf16, #tpu.memory_space<vmem>>, vector<8x32xbf16>
    %c0_1 = arith.constant 0 : index
    %c0_2 = arith.constant 0 : index
    %1 = vector.load %arg2[%c0_1, %c0_2] : memref<32x64xbf16, #tpu.memory_space<vmem>>, vector<32x64xbf16>
    %cst = arith.constant dense<0.000000e+00> : vector<8x64xf32>
    %2 = tpu.matmul %0, %1, %cst {dimension_numbers = #tpu.dot_dimension_numbers<[1], [0], [0], [1], [0, 0, 1, 1], [], []>} : vector<8x32xbf16>, vector<32x64xbf16>, vector<8x64xf32> -> vector<8x64xf32>
    %c0_3 = arith.constant 0 : index
    %c0_4 = arith.constant 0 : index
    %3 = vector.load %arg3[%c0_3, %c0_4] : memref<1x64xf32, #tpu.memory_space<vmem>>, vector<1x64xf32>
    %4 = vector.broadcast %3 : vector<1x64xf32> to vector<8x64xf32>
    %5 = arith.addf %2, %4 : vector<8x64xf32>
    %cst_5 = arith.constant 0.000000e+00 : f32
    %6 = vector.broadcast %cst_5 : f32 to vector<8x64xf32>
    %7 = arith.maximumf %5, %6 : vector<8x64xf32>
    %8 = arith.truncf %7 : vector<8x64xf32> to vector<8x64xbf16>
    %c0_6 = arith.constant 0 : index
    %c0_7 = arith.constant 0 : index
    %9 = vector.load %arg4[%c0_6, %c0_7] : memref<64x128xbf16, #tpu.memory_space<vmem>>, vector<64x128xbf16>
    %cst_8 = arith.constant dense<0.000000e+00> : vector<8x128xf32>
    %10 = tpu.matmul %8, %9, %cst_8 {dimension_numbers = #tpu.dot_dimension_numbers<[1], [0], [0], [1], [0, 0, 1, 1], [], []>} : vector<8x64xbf16>, vector<64x128xbf16>, vector<8x128xf32> -> vector<8x128xf32>
    %c0_9 = arith.constant 0 : index
    %c0_10 = arith.constant 0 : index
    %11 = vector.load %arg5[%c0_9, %c0_10] : memref<1x128xf32, #tpu.memory_space<vmem>>, vector<1x128xf32>
    %12 = vector.broadcast %11 : vector<1x128xf32> to vector<8x128xf32>
    %13 = arith.addf %10, %12 : vector<8x128xf32>
    %c0_11 = arith.constant 0 : index
    %c0_12 = arith.constant 0 : index
    %14 = vector.load %arg6[%c0_11, %c0_12] : memref<8x128xf32, #tpu.memory_space<vmem>>, vector<8x128xf32>
    tpu.vector_store %arg6[%c0_11, %c0_12], %13 {strides = array<i32>} : memref<8x128xf32, #tpu.memory_space<vmem>>, vector<8x128xf32>,
    return
  }
  func.func @transform_0(%arg0: i32) -> (i32, i32) {
    %c0_i32 = arith.constant 0 : i32
    %c0_i32_0 = arith.constant 0 : i32
    return %arg0, %c0_i32 : i32, i32
  }
  func.func @transform_1(%arg0: i32) -> (i32, i32) {
    %c0_i32 = arith.constant 0 : i32
    %c0_i32_0 = arith.constant 0 : i32
    %c0_i32_1 = arith.constant 0 : i32
    return %c0_i32, %c0_i32_0 : i32, i32
  }
  func.func @transform_2(%arg0: i32) -> (i32, i32) {
    %c0_i32 = arith.constant 0 : i32
    %c0_i32_0 = arith.constant 0 : i32
    %c0_i32_1 = arith.constant 0 : i32
    return %c0_i32, %c0_i32_0 : i32, i32
  }
  func.func @transform_3(%arg0: i32) -> (i32, i32) {
    %c0_i32 = arith.constant 0 : i32
    %c0_i32_0 = arith.constant 0 : i32
    %c0_i32_1 = arith.constant 0 : i32
    return %c0_i32, %c0_i32_0 : i32, i32
  }
  func.func @transform_4(%arg0: i32) -> (i32, i32) {
    %c0_i32 = arith.constant 0 : i32
    %c0_i32_0 = arith.constant 0 : i32
    %c0_i32_1 = arith.constant 0 : i32
    return %c0_i32, %c0_i32_0 : i32, i32
  }
  func.func @transform_5(%arg0: i32) -> (i32, i32) {
    %c0_i32 = arith.constant 0 : i32
    %c0_i32_0 = arith.constant 0 : i32
    return %arg0, %c0_i32 : i32, i32
  }
}

</mosaic_0001>

<llo_original>
// kernel: tpu_custom_call.1
$region0: #{tpu_custom_call.1}
  #allocation0 [shape = 'u32[]', space=smem, size = 0x4, offset = 0x4, fixed_abs, tag = 'smem constant byte address 0x4 - core index']
  #allocation1 [shape = 'u32[72,128]{1,0:T(1,128)}', space=vmem, size = 0x9000, scoped, tag = 'internal scratch']
  %s0 = inlined_call_operand.hbm [shape: bf16[8,32], index: 0, kind: input, shape index: {}]
  %s1 = inlined_call_operand.hbm [shape: bf16[32,64], index: 1, kind: input, shape index: {}]
  %s2 = inlined_call_operand.vmem [shape: f32[1,64], index: 2, kind: input, shape index: {}]
  %s3 = inlined_call_operand.hbm [shape: bf16[64,128], index: 3, kind: input, shape index: {}]
  %s4 = inlined_call_operand.vmem [shape: f32[1,128], index: 4, kind: input, shape index: {}]
  %s5 = inlined_call_operand.hbm [shape: f32[8,128], index: 5, kind: output, shape index: {}]
  %s6 = sld [smem:[#allocation0]]
  $region42: #{tpu_custom_call.1} parent=0
    _
  %s8 = ssub.s32 1, %s6
  %s9 = scalar_select 0, %s8, %s6
  $region1: #{tpu_custom_call.1} parent=0
    #allocation2 [shape = 'u8[2048]{0}', space=vmem, size = 0x800, scoped, tag = 'input window, operand 0, single buffered']
    #allocation3 [shape = 's32[1]{0}', space=sflag, size = 0x4, scoped, tag = 'scoped memory for tpu_custom_call.1']
    #allocation4 [shape = 's32[1]{0}', space=sflag, size = 0x4, scoped, tag = 'scoped memory for tpu_custom_call.1']
    #allocation5 [shape = 'u8[8192]{0}', space=vmem, size = 0x2000, scoped, tag = 'input window, operand 1, single buffered']
    #allocation6 [shape = 's32[1]{0}', space=sflag, size = 0x4, scoped, tag = 'scoped memory for tpu_custom_call.1']
    #allocation7 [shape = 'u8[16384]{0}', space=vmem, size = 0x4000, scoped, tag = 'input window, operand 3, single buffered']
    #allocation8 [shape = 'u8[4096]{0}', space=vmem, size = 0x1000, scoped, tag = 'output window, operand 0, single buffered']
    %10 = vsyncpa [#allocation3], 0
    %11 = vsyncpa [#allocation6], 0
    %12 = vsyncpa [#allocation4], 0
    // Predicated region
    $region2: #{tpu_custom_call.1} parent=1 // pred_check
      _
    $region3: #{tpu_custom_call.1} parent=1 // pred_check_branch
      %14 = sbr.rel (0) target = $region5
    $region4: #{tpu_custom_call.1} parent=1 // pred_region
      %16 = vsyncadd [#allocation3], 0
      %s18 = sshll.u32 %s0, 4
      %s19 = int_to_ptr.hbm [resolvable:$true] %s18
      %s20 = sshll.u32 [#allocation2], 4
      %s21 = int_to_ptr.vmem [resolvable:$true] %s20
      %23 = dma.hbm_to_vmem [thread:$0]  %s19, 64, %s21, [#allocation3]
    $region5: #{tpu_custom_call.1} parent=1 // pred_fallthru
      _
    // Predicated region
    $region6: #{tpu_custom_call.1} parent=1 // pred_check
      _
    $region7: #{tpu_custom_call.1} parent=1 // pred_check_branch
      %25 = sbr.rel (0) target = $region9
    $region8: #{tpu_custom_call.1} parent=1 // pred_region
      %27 = vsyncadd [#allocation6], 0
      %s28 = sshll.u32 %s1, 4
      %s29 = int_to_ptr.hbm [resolvable:$true] %s28
      %s30 = sshll.u32 [#allocation5], 4
      %s31 = int_to_ptr.vmem [resolvable:$true] %s30
      %36 = dma.hbm_to_vmem [thread:$0]  %s29, 256, %s31, [#allocation6], 64, 64, 4
    $region9: #{tpu_custom_call.1} parent=1 // pred_fallthru
      _
    // Predicated region
    $region10: #{tpu_custom_call.1} parent=1 // pred_check
      _
    $region11: #{tpu_custom_call.1} parent=1 // pred_check_branch
      %38 = sbr.rel (0) target = $region13
    $region12: #{tpu_custom_call.1} parent=1 // pred_region
      _
    $region13: #{tpu_custom_call.1} parent=1 // pred_fallthru
      _
    // Predicated region
    $region14: #{tpu_custom_call.1} parent=1 // pred_check
      _
    $region15: #{tpu_custom_call.1} parent=1 // pred_check_branch
      %40 = sbr.rel (0) target = $region17
    $region16: #{tpu_custom_call.1} parent=1 // pred_region
      %42 = vsyncadd [#allocation6], 0
      %s43 = sshll.u32 %s3, 4
      %s44 = int_to_ptr.hbm [resolvable:$true] %s43
      %s45 = sshll.u32 [#allocation7], 4
      %s46 = int_to_ptr.vmem [resolvable:$true] %s45
      %51 = dma.hbm_to_vmem [thread:$0]  %s44, 512, %s46, [#allocation6], 64, 64, 4
    $region17: #{tpu_custom_call.1} parent=1 // pred_fallthru
      _
    // Predicated region
    $region18: #{tpu_custom_call.1} parent=1 // pred_check
      _
    $region19: #{tpu_custom_call.1} parent=1 // pred_check_branch
      %53 = sbr.rel (0) target = $region21
    $region20: #{tpu_custom_call.1} parent=1 // pred_region
      _
    $region21: #{tpu_custom_call.1} parent=1 // pred_fallthru
      _
    // Predicated region
    $region22: #{tpu_custom_call.1} parent=1 // pred_check
      _
    $region23: #{tpu_custom_call.1} parent=1 // pred_check_branch
      %55 = sbr.rel (0) target = $region25
    $region24: #{tpu_custom_call.1} parent=1 // pred_region
      %57 = dma.done [#allocation3], 64
    $region25: #{tpu_custom_call.1} parent=1 // pred_fallthru
      _
    // Predicated region
    $region26: #{tpu_custom_call.1} parent=1 // pred_check
      _
    $region27: #{tpu_custom_call.1} parent=1 // pred_check_branch
      %59 = sbr.rel (0) target = $region29
    $region28: #{tpu_custom_call.1} parent=1 // pred_region
      %61 = dma.done [#allocation6], 256
    $region29: #{tpu_custom_call.1} parent=1 // pred_fallthru
      _
    // Predicated region
    $region30: #{tpu_custom_call.1} parent=1 // pred_check
      _
    $region31: #{tpu_custom_call.1} parent=1 // pred_check_branch
      %63 = sbr.rel (0) target = $region33
    $region32: #{tpu_custom_call.1} parent=1 // pred_region
      %65 = dma.done [#allocation6], 512
    $region33: #{tpu_custom_call.1} parent=1 // pred_fallthru
      _
    %v67 = vld [vmem:[#allocation2] sm:$0xf]
    %v68 = vld [vmem:[#allocation5] sm:$0xf]
    %v69 = vld [vmem:[#allocation5 + $0x4] sm:$0xf]
    %v70 = vld [vmem:[#allocation5 + $0x8] sm:$0xf]
    %v71 = vld [vmem:[#allocation5 + $0xc] sm:$0xf]
    %v72 = vld [vmem:[%s2] sm:$0x1]
    %v74 = vperm.slane %v72, 0
    %v80 = vunpack.c.l.b16 %v68
    %v81 = vunpack.c.l.b16 %v69
    %v82 = vunpack.c.l.b16 %v70
    %v83 = vunpack.c.l.b16 %v71
    %v84 = vpack.c.b16 %v81, %v80
    %v85 = vpack.c.b16 %v83, %v82
    %vm88 = vcmask 261120
    %v90 = vsel %vm88, %v67, 0
    %92 = vmatpush.bf16.msra.mxu0 0
    %93 = vmatpush.bf16.msra.mxu0 0
    %94 = vmatpush.bf16.msra.mxu0 0
    %95 = vmatpush.bf16.msra.mxu0 0
    %96 = vmatpush.bf16.msra.mxu0 0
    %97 = vmatpush.bf16.msra.mxu0 0
    %98 = vmatpush.bf16.msra.mxu0 %v85
    %99 = vmatpush.bf16.msra.mxu0 %v84
    %100 = vmatmul.bf16.gmra.mxu0 %v90
    %v101 = vpop.f32.mrf.mxu0
    %v102 = vadd.f32 %v74, %v101
    %v103 = vpop.f32.mrf.mxu0
    %104 = vdwg.mxu0
    %v105 = vmax.f32 %v102, 0.0
    %v106 = vpack.c.bf16 %v105, %v105
    %v107 = vld [vmem:[#allocation7] sm:$0xf]
    %v108 = vld [vmem:[#allocation7 + $0x4] sm:$0xf]
    %v109 = vld [vmem:[#allocation7 + $0x8] sm:$0xf]
    %v110 = vld [vmem:[#allocation7 + $0xc] sm:$0xf]
    %v111 = vld [vmem:[#allocation7 + $0x10] sm:$0xf]
    %v112 = vld [vmem:[#allocation7 + $0x14] sm:$0xf]
    %v113 = vld [vmem:[#allocation7 + $0x18] sm:$0xf]
    %v114 = vld [vmem:[#allocation7 + $0x1c] sm:$0xf]
    %v115 = vld [vmem:[%s4] sm:$0x1]
    %v117 = vperm.slane %v115, 0
    %v127 = vunpack.c.l.b16 %v107
    %v128 = vunpack.c.l.b16 %v108
    %v129 = vunpack.c.l.b16 %v109
    %v130 = vunpack.c.l.b16 %v110
    %v131 = vunpack.c.l.b16 %v111
    %v132 = vunpack.c.l.b16 %v112
    %v133 = vunpack.c.l.b16 %v113
    %v134 = vunpack.c.l.b16 %v114
    %v135 = vpack.c.b16 %v128, %v127
    %v136 = vpack.c.b16 %v130, %v129
    %v137 = vpack.c.b16 %v132, %v131
    %v138 = vpack.c.b16 %v134, %v133
    %vm143 = vcmask 523264
    %v145 = vsel %vm143, %v106, 0
    %147 = vmatpush.bf16.msra.mxu0 0
    %148 = vmatpush.bf16.msra.mxu0 0
    %149 = vmatpush.bf16.msra.mxu0 0
    %150 = vmatpush.bf16.msra.mxu0 0
    %151 = vmatpush.bf16.msra.mxu0 %v138
    %152 = vmatpush.bf16.msra.mxu0 %v137
    %153 = vmatpush.bf16.msra.mxu0 %v136
    %154 = vmatpush.bf16.msra.mxu0 %v135
    %155 = vmatmul.bf16.gmra.mxu0 %v145
    %v156 = vpop.f32.mrf.mxu0
    %v157 = vadd.f32 %v117, %v156
    %v158 = vpop.f32.mrf.mxu0
    %159 = vdwg.mxu0
    %160 = vst [vmem:[#allocation8] sm:$0xff] %v157
    // Predicated region
    $region34: #{tpu_custom_call.1} parent=1 // pred_check
      _
    $region35: #{tpu_custom_call.1} parent=1 // pred_check_branch
      %162 = sbr.rel (0) target = $region37
    $region36: #{tpu_custom_call.1} parent=1 // pred_region
      %164 = vsyncadd [#allocation4], 0
      %s166 = sshll.u32 [#allocation8], 4
      %s167 = int_to_ptr.vmem [resolvable:$true] %s166
      %s168 = sshll.u32 %s5, 4
      %s169 = int_to_ptr.hbm [resolvable:$true] %s168
      %171 = dma.vmem_to_hbm [thread:$0]  %s167, 128, %s169, [#allocation4]
    $region37: #{tpu_custom_call.1} parent=1 // pred_fallthru
      _
    // Predicated region
    $region38: #{tpu_custom_call.1} parent=1 // pred_check
      _
    $region39: #{tpu_custom_call.1} parent=1 // pred_check_branch
      %173 = sbr.rel (0) target = $region41
    $region40: #{tpu_custom_call.1} parent=1 // pred_region
      %175 = dma.done [#allocation4], 128
    $region41: #{tpu_custom_call.1} parent=1 // pred_fallthru
      _
    %176 = vsyncpa [#allocation3], 1
    %177 = vsyncpa [#allocation6], 1
    %178 = vsyncpa [#allocation4], 1

</llo_original>
